<compile_context>
chip_gen: v7x
topology: tpu7x:2x2x1
jax: 0.10.0
libtpu: 0.0.40
codegen_flags: <defaults>
</compile_context>

<pallas_src>
import functools

import jax
import jax.numpy as jnp
import numpy as np
from jax.experimental import pallas as pl
from jax.experimental.pallas import tpu as pltpu


# Styles whose output feature width equals the input width (pure elementwise).
_ELEMENTWISE = ("sum", "diff", "abs-diff", "mul")

# Feature-axis multiplier of the output (None -> n_args, for plain concat).
_OUT_MULT = {
    "sum": 1, "diff": 1, "abs-diff": 1, "mul": 1,
    "concat": None, "concat-diff": 3, "concat-abs-diff": 3,
    "concat-mul-diff": 4,
}


def _flops_per_elem(merge_type, n_args):
    return {
        "sum": max(1, n_args - 1), "diff": 1, "abs-diff": 2, "mul": 1,
        "concat": 0, "concat-diff": 1, "concat-abs-diff": 2,
        "concat-mul-diff": 3,
    }[merge_type]


def _round_up(x, m):
    return (x + m - 1) // m * m


def _sublane(dtype):
    # Second-minor tile granularity: 8 (4-byte), 16 (2-byte), 32 (1-byte).
    return max(8, 32 // jnp.dtype(dtype).itemsize)


# Double-buffered working-set budget per grid step.  Kept well inside the
# scoped-VMEM limits of every generation (v5e/v6e 128 MiB physical, v7x 64 MiB
# physical / 32 MiB default scoped).
_VMEM_BUDGET_BYTES = 8 * 1024 * 1024
_VMEM_LIMIT_BYTES = 32 * 1024 * 1024


def _pick_row_tile(n_rows, bytes_per_row, sub):
    """Largest row tile (multiple of `sub`) whose double-buffered in+out
    footprint fits the VMEM budget."""
    tm = _VMEM_BUDGET_BYTES // max(1, 2 * bytes_per_row)
    tm = max(sub, (tm // sub) * sub)
    tm = min(tm, _round_up(n_rows, sub))
    return tm


# --------------------------- elementwise styles ------------------------------
def _elementwise_kernel(merge_type, n_args):
    def kernel(*refs):
        ins = refs[:n_args]
        out = refs[n_args]
        if merge_type == "sum":
            acc = ins[0][...]
            for r in ins[1:]:
                acc = acc + r[...]
            out[...] = acc
        elif merge_type == "diff":
            out[...] = ins[0][...] - ins[1][...]
        elif merge_type == "abs-diff":
            out[...] = jnp.abs(ins[0][...] - ins[1][...])
        elif merge_type == "mul":
            out[...] = ins[0][...] * ins[1][...]
        else:
            raise ValueError(merge_type)
    return kernel


def _merge_elementwise(merge_type, args):
    x0 = args[0]
    orig_shape = x0.shape
    dtype = x0.dtype
    itemsize = jnp.dtype(dtype).itemsize
    n_args = len(args)
    n = int(np.prod(orig_shape)) if len(orig_shape) else 1

    # Lane-dense 2-D view: last dim a multiple of 128 so every store is a full,
    # unmasked vst even if the model's feature dim is < 128.
    lane = 1024 if n >= 8 * 1024 else 128
    rows = pl.cdiv(n, lane)

    sub = _sublane(dtype)
    bytes_per_row = (n_args + 1) * lane * itemsize
    tm = _pick_row_tile(rows, bytes_per_row, sub)
    rows_pad = _round_up(rows, tm)
    n_pad = rows_pad * lane

    flat = []
    for a in args:
        f = a.reshape(-1)
        if n_pad != n:
            f = jnp.pad(f, (0, n_pad - n))
        flat.append(f.reshape(rows_pad, lane))

    spec = pl.BlockSpec((tm, lane), lambda i: (i, 0))

    out = pl.pallas_call(
        _elementwise_kernel(merge_type, n_args),
        out_shape=jax.ShapeDtypeStruct((rows_pad, lane), dtype),
        grid=(rows_pad // tm,),
        in_specs=[spec] * n_args,
        out_specs=spec,
        compiler_params=pltpu.CompilerParams(
            dimension_semantics=("parallel",),
            vmem_limit_bytes=_VMEM_LIMIT_BYTES),
        cost_estimate=pl.CostEstimate(
            flops=_flops_per_elem(merge_type, n_args) * n,
            transcendentals=0,
            bytes_accessed=(n_args + 1) * n * itemsize),
    )(*flat)

    out = out.reshape(-1)
    if n_pad != n:
        out = out[:n]
    return out.reshape(orig_shape)


# ----------------------------- concat styles ---------------------------------
def _concat_pieces(merge_type, ins):
    if merge_type == "concat":
        return list(ins)
    x, y = ins
    if merge_type == "concat-diff":
        return [x, y, x - y]
    if merge_type == "concat-abs-diff":
        return [x, y, jnp.abs(x - y)]
    if merge_type == "concat-mul-diff":
        return [x, y, x * y, jnp.abs(x - y)]
    raise ValueError(merge_type)


def _concat_kernel(merge_type, n_args):
    def kernel(*refs):
        ins = [r[...] for r in refs[:n_args]]
        out = refs[n_args]
        # Build the full (tm, mult*d) tile in registers and issue ONE
        # full-block store, instead of `mult` masked partial writes at
        # interior lane offsets (keeps the single vector-store slot fed with
        # full vregs; concatenation is aligned/free when d % 128 == 0).
        out[...] = jnp.concatenate(_concat_pieces(merge_type, ins), axis=-1)
    return kernel


def _merge_concat(merge_type, args):
    x0 = args[0]
    orig_shape = x0.shape
    d = orig_shape[-1]
    dtype = x0.dtype
    itemsize = jnp.dtype(dtype).itemsize
    n_args = len(args)

    mult = _OUT_MULT[merge_type]
    if mult is None:
        mult = n_args

    m = int(np.prod(orig_shape[:-1])) if len(orig_shape) > 1 else 1

    sub = _sublane(dtype)
    bytes_per_row = (n_args + mult) * d * itemsize
    tm = _pick_row_tile(m, bytes_per_row, sub)
    m_pad = _round_up(m, tm)

    flat = []
    for a in args:
        f = a.reshape(m, d)
        if m_pad != m:
            f = jnp.pad(f, ((0, m_pad - m), (0, 0)))
        flat.append(f)

    in_spec = pl.BlockSpec((tm, d), lambda i: (i, 0))
    out_spec = pl.BlockSpec((tm, mult * d), lambda i: (i, 0))

    out = pl.pallas_call(
        _concat_kernel(merge_type, n_args),
        out_shape=jax.ShapeDtypeStruct((m_pad, mult * d), dtype),
        grid=(m_pad // tm,),
        in_specs=[in_spec] * n_args,
        out_specs=out_spec,
        compiler_params=pltpu.CompilerParams(
            dimension_semantics=("parallel",),
            vmem_limit_bytes=_VMEM_LIMIT_BYTES),
        cost_estimate=pl.CostEstimate(
            flops=_flops_per_elem(merge_type, n_args) * m * d,
            transcendentals=0,
            bytes_accessed=(n_args + mult) * m * d * itemsize),
    )(*flat)

    if m_pad != m:
        out = out[:m]
    return out.reshape(orig_shape[:-1] + (mult * d,))


# ------------------------------- public API ----------------------------------
def merge(merge_type, *args):
    """JAX/Pallas equivalent of Merge(merge_type)(*args)."""
    assert merge_type in _OUT_MULT, merge_type
    for a in args[1:]:
        assert a.shape == args[0].shape, "all merge inputs must share a shape"
    if merge_type in _ELEMENTWISE:
        return _merge_elementwise(merge_type, args)
    return _merge_concat(merge_type, args)


class Merge:
    """Mirror of the PyTorch module (no parameters)."""

    def __init__(self, merge_type):
        self.merge_type = merge_type

    def __call__(self, *args):
        return merge(self.merge_type, *args)


# ---------------- pure-JAX references (mirror the PyTorch lambdas) -----------
def _ref(merge_type, *args):
    if merge_type == "sum":
        return functools.reduce(lambda a, b: a + b, args)
    if merge_type == "concat":
        return jnp.concatenate(args, axis=-1)
    if merge_type == "diff":
        return args[0] - args[1]
    if merge_type == "abs-diff":
        return jnp.abs(args[0] - args[1])
    if merge_type == "concat-diff":
        x, y = args
        return jnp.concatenate((x, y, x - y), axis=-1)
    if merge_type == "concat-abs-diff":
        x, y = args
        return jnp.concatenate((x, y, jnp.abs(x - y)), axis=-1)
    if merge_type == "mul":
        return args[0] * args[1]
    if merge_type == "concat-mul-diff":
        x, y = args
        return jnp.concatenate((x, y, x * y, jnp.abs(x - y)), axis=-1)
    raise ValueError(merge_type)


if __name__ == "__main__":
    key = jax.random.PRNGKey(0)
    k1, k2, k3 = jax.random.split(key, 3)

    B, S, D = 2, 8, 32  # small shapes; feature axis last
    x = jax.random.normal(k1, (B, S, D), dtype=jnp.float32)
    y = jax.random.normal(k2, (B, S, D), dtype=jnp.float32)
    z = jax.random.normal(k3, (B, S, D), dtype=jnp.float32)

    # Binary styles.
    for style in ["sum", "diff", "abs-diff", "mul",
                  "concat", "concat-diff", "concat-abs-diff",
                  "concat-mul-diff"]:
        out = Merge(style)(x, y)
        jax.block_until_ready(out)
        ref = _ref(style, x, y)
        np.testing.assert_allclose(np.asarray(out), np.asarray(ref),
                                   rtol=1e-6, atol=1e-6)

    # Variadic styles (sum / concat accept any number of args).
    for style in ["sum", "concat"]:
        out = Merge(style)(x, y, z)
        jax.block_until_ready(out)
        ref = _ref(style, x, y, z)
        np.testing.assert_allclose(np.asarray(out), np.asarray(ref),
                                   rtol=1e-6, atol=1e-6)

    print("KERNEL_OK")
</pallas_src>

<mosaic_0001>
module attributes {stable_mosaic.version = 11 : i64} {
  func.func @kernel(%arg0: i32, %arg1: memref<8x128xf32, #tpu.memory_space<vmem>>, %arg2: memref<8x128xf32, #tpu.memory_space<vmem>>, %arg3: memref<8x128xf32, #tpu.memory_space<vmem>>) attributes {dimension_semantics = [#tpu.dimension_semantics<parallel>], iteration_bounds = array<i64: 1>, scalar_prefetch = 0 : i64, scratch_operands = 0 : i64, tpu.core_type = #tpu.core_type<tc>, window_params = [{transform_indices = @transform_0, window_bounds = array<i64: 8, 128>}, {transform_indices = @transform_1, window_bounds = array<i64: 8, 128>}, {transform_indices = @transform_2, window_bounds = array<i64: 8, 128>}]} {
    %c0 = arith.constant 0 : index
    %c0_0 = arith.constant 0 : index
    %0 = vector.load %arg1[%c0, %c0_0] : memref<8x128xf32, #tpu.memory_space<vmem>>, vector<8x128xf32>
    %c0_1 = arith.constant 0 : index
    %c0_2 = arith.constant 0 : index
    %1 = vector.load %arg2[%c0_1, %c0_2] : memref<8x128xf32, #tpu.memory_space<vmem>>, vector<8x128xf32>
    %2 = arith.addf %0, %1 : vector<8x128xf32>
    %c0_3 = arith.constant 0 : index
    %c0_4 = arith.constant 0 : index
    %3 = vector.load %arg3[%c0_3, %c0_4] : memref<8x128xf32, #tpu.memory_space<vmem>>, vector<8x128xf32>
    tpu.vector_store %arg3[%c0_3, %c0_4], %2 {strides = array<i32>} : memref<8x128xf32, #tpu.memory_space<vmem>>, vector<8x128xf32>,
    return
  }
  func.func @transform_0(%arg0: i32) -> (i32, i32) {
    %c0_i32 = arith.constant 0 : i32
    %c0_i32_0 = arith.constant 0 : i32
    return %arg0, %c0_i32 : i32, i32
  }
  func.func @transform_1(%arg0: i32) -> (i32, i32) {
    %c0_i32 = arith.constant 0 : i32
    %c0_i32_0 = arith.constant 0 : i32
    return %arg0, %c0_i32 : i32, i32
  }
  func.func @transform_2(%arg0: i32) -> (i32, i32) {
    %c0_i32 = arith.constant 0 : i32
    %c0_i32_0 = arith.constant 0 : i32
    return %arg0, %c0_i32 : i32, i32
  }
}

</mosaic_0001>

<llo_original>
// kernel: tpu_custom_call.1
$region0: #{tpu_custom_call.1}
  #allocation0 [shape = 'u32[]', space=smem, size = 0x4, offset = 0x4, fixed_abs, tag = 'smem constant byte address 0x4 - core index']
  #allocation1 [shape = 'u32[144,128]{1,0:T(1,128)}', space=vmem, size = 0x12000, scoped, tag = 'internal scratch']
  %s0 = inlined_call_operand.hbm [shape: f32[8,128], index: 0, kind: input, shape index: {}]
  %s1 = inlined_call_operand.hbm [shape: f32[8,128], index: 1, kind: input, shape index: {}]
  %s2 = inlined_call_operand.hbm [shape: f32[8,128], index: 2, kind: output, shape index: {}]
  %s3 = sld [smem:[#allocation0]]
  $region26: #{tpu_custom_call.1} parent=0
    _
  %s5 = ssub.s32 1, %s3
  %s6 = scalar_select 0, %s5, %s3
  $region1: #{tpu_custom_call.1} parent=0
    #allocation2 [shape = 'u8[4096]{0}', space=vmem, size = 0x1000, scoped, tag = 'input window, operand 0, single buffered']
    #allocation3 [shape = 's32[1]{0}', space=sflag, size = 0x4, scoped, tag = 'scoped memory for tpu_custom_call.1']
    #allocation4 [shape = 's32[1]{0}', space=sflag, size = 0x4, scoped, tag = 'scoped memory for tpu_custom_call.1']
    #allocation5 [shape = 'u8[4096]{0}', space=vmem, size = 0x1000, scoped, tag = 'input window, operand 1, single buffered']
    #allocation6 [shape = 's32[1]{0}', space=sflag, size = 0x4, scoped, tag = 'scoped memory for tpu_custom_call.1']
    #allocation7 [shape = 'u8[4096]{0}', space=vmem, size = 0x1000, scoped, tag = 'output window, operand 0, single buffered']
    %7 = vsyncpa [#allocation3], 0
    %8 = vsyncpa [#allocation6], 0
    %9 = vsyncpa [#allocation4], 0
    // Predicated region
    $region2: #{tpu_custom_call.1} parent=1 // pred_check
      _
    $region3: #{tpu_custom_call.1} parent=1 // pred_check_branch
      %11 = sbr.rel (0) target = $region5
    $region4: #{tpu_custom_call.1} parent=1 // pred_region
      %s13 = ssub.s32 128, 128
      %14 = vsyncadd [#allocation3], %s13
      %s16 = sshll.u32 [#allocation2], 4
      %s17 = int_to_ptr.vmem [resolvable:$true] %s16
      %19 = dma.hbm_to_vmem [thread:$0]  %s0, 128, %s17, [#allocation3]
    $region5: #{tpu_custom_call.1} parent=1 // pred_fallthru
      _
    // Predicated region
    $region6: #{tpu_custom_call.1} parent=1 // pred_check
      _
    $region7: #{tpu_custom_call.1} parent=1 // pred_check_branch
      %21 = sbr.rel (0) target = $region9
    $region8: #{tpu_custom_call.1} parent=1 // pred_region
      %s23 = ssub.s32 128, 128
      %24 = vsyncadd [#allocation6], %s23
      %s26 = sshll.u32 [#allocation5], 4
      %s27 = int_to_ptr.vmem [resolvable:$true] %s26
      %29 = dma.hbm_to_vmem [thread:$0]  %s1, 128, %s27, [#allocation6]
    $region9: #{tpu_custom_call.1} parent=1 // pred_fallthru
      _
    // Predicated region
    $region10: #{tpu_custom_call.1} parent=1 // pred_check
      _
    $region11: #{tpu_custom_call.1} parent=1 // pred_check_branch
      %31 = sbr.rel (0) target = $region13
    $region12: #{tpu_custom_call.1} parent=1 // pred_region
      %32 = dma.done [#allocation3], 128
    $region13: #{tpu_custom_call.1} parent=1 // pred_fallthru
      _
    // Predicated region
    $region14: #{tpu_custom_call.1} parent=1 // pred_check
      _
    $region15: #{tpu_custom_call.1} parent=1 // pred_check_branch
      %34 = sbr.rel (0) target = $region17
    $region16: #{tpu_custom_call.1} parent=1 // pred_region
      %35 = dma.done [#allocation6], 128
    $region17: #{tpu_custom_call.1} parent=1 // pred_fallthru
      _
    %v36 = vld [vmem:[#allocation2] sm:$0xff]
    %v37 = vld [vmem:[#allocation5] sm:$0xff]
    %v38 = vadd.f32 %v36, %v37
    %39 = vst [vmem:[#allocation7] sm:$0xff] %v38
    // Predicated region
    $region18: #{tpu_custom_call.1} parent=1 // pred_check
      _
    $region19: #{tpu_custom_call.1} parent=1 // pred_check_branch
      %41 = sbr.rel (0) target = $region21
    $region20: #{tpu_custom_call.1} parent=1 // pred_region
      %s43 = ssub.s32 128, 128
      %44 = vsyncadd [#allocation4], %s43
      %s46 = sshll.u32 [#allocation7], 4
      %s47 = int_to_ptr.vmem [resolvable:$true] %s46
      %49 = dma.vmem_to_hbm [thread:$0]  %s47, 128, %s2, [#allocation4]
    $region21: #{tpu_custom_call.1} parent=1 // pred_fallthru
      _
    // Predicated region
    $region22: #{tpu_custom_call.1} parent=1 // pred_check
      _
    $region23: #{tpu_custom_call.1} parent=1 // pred_check_branch
      %51 = sbr.rel (0) target = $region25
    $region24: #{tpu_custom_call.1} parent=1 // pred_region
      %52 = dma.done [#allocation4], 128
    $region25: #{tpu_custom_call.1} parent=1 // pred_fallthru
      _
    %53 = vsyncpa [#allocation3], 1
    %54 = vsyncpa [#allocation6], 1
    %55 = vsyncpa [#allocation4], 1

</llo_original>
